<compile_context>
chip_gen: v7x
topology: tpu7x:2x2x1
jax: 0.10.0
libtpu: 0.0.40
codegen_flags: <defaults>
</compile_context>

<pallas_src>
import jax
import jax.numpy as jnp
from jax.experimental import pallas as pl
from jax.experimental.pallas import tpu as pltpu


def _mlp_kernel(x_ref, w1_ref, b1_ref, w2_ref, b2_ref, o_ref):
    # fc1: x @ W1 + b1, then ReLU   (MXU matmul, VPU bias-add + max)
    h = jnp.dot(x_ref[...], w1_ref[...], preferred_element_type=jnp.float32)
    h = jnp.maximum(h + b1_ref[...], 0.0)          # (TB, H) + (1, H) broadcast
    # output_layer: replace the N=1 matmul with a VPU multiply + XLU row-reduce.
    y = jnp.sum(h * w2_ref[...], axis=-1, keepdims=True) + b2_ref[...]
    o_ref[...] = y.astype(o_ref.dtype)             # (TB, 1)


def regression_model_forward(x, w1, b1, w2, b2, *, tb=128):
    """x: (B, input_size); w1: (input_size, hidden); b1: (hidden,);
       w2: (hidden, 1); b2: (1,). Returns (B, 1)."""
    B, in_size = x.shape
    hidden = w1.shape[1]

    # Batch tile: full batch when small, else 128 rows per grid step (f32 tile
    # of 128 x in_size x 4 B x 2 buffers is far under the v7x 32 MiB scoped /
    # 64 MiB physical VMEM even with the resident weights).
    TB = B if B < tb else tb
    pad = (-B) % TB
    if pad:
        x = jnp.pad(x, ((0, pad), (0, 0)))
    Bp = B + pad
    grid = (Bp // TB,)

    w2_row = w2.reshape(1, hidden)   # (hidden, 1) -> (1, hidden) row for VPU reduce
    b1_2d = b1.reshape(1, hidden)
    b2_2d = b2.reshape(1, 1)

    itemsize = jnp.dtype(x.dtype).itemsize
    cost = pl.CostEstimate(
        flops=2 * Bp * in_size * hidden + 2 * Bp * hidden,
        transcendentals=0,
        bytes_accessed=(Bp * in_size + in_size * hidden + hidden
                        + hidden + 1 + Bp) * itemsize,
    )

    out = pl.pallas_call(
        _mlp_kernel,
        out_shape=jax.ShapeDtypeStruct((Bp, 1), x.dtype),
        grid_spec=pltpu.PrefetchScalarGridSpec(
            num_scalar_prefetch=0,
            grid=grid,
            in_specs=[
                pl.BlockSpec((TB, in_size), lambda i: (i, 0)),      # x (streamed)
                pl.BlockSpec((in_size, hidden), lambda i: (0, 0)),  # W1 (resident)
                pl.BlockSpec((1, hidden), lambda i: (0, 0)),        # b1 (resident)
                pl.BlockSpec((1, hidden), lambda i: (0, 0)),        # W2 row (resident)
                pl.BlockSpec((1, 1), lambda i: (0, 0)),             # b2 (resident)
            ],
            out_specs=pl.BlockSpec((TB, 1), lambda i: (i, 0)),
        ),
        compiler_params=pltpu.CompilerParams(
            dimension_semantics=("parallel",),  # shards batch across TCs on v7x
        ),
        cost_estimate=cost,
    )(x, w1, b1_2d, w2_row, b2_2d)

    return out[:B] if pad else out


if __name__ == "__main__":
    # Small shapes consistent with the module: batch=8, input_size=16, hidden=32.
    batch, input_size, hidden_size = 8, 16, 32

    key = jax.random.PRNGKey(0)
    k_x, k_w1, k_b1, k_w2, k_b2 = jax.random.split(key, 5)

    x = jax.random.normal(k_x, (batch, input_size), dtype=jnp.float32)

    # Deterministic parameter init (uniform, roughly matching nn.Linear's scale).
    bound1 = 1.0 / (input_size ** 0.5)
    w1 = jax.random.uniform(k_w1, (input_size, hidden_size),
                            minval=-bound1, maxval=bound1, dtype=jnp.float32)
    b1 = jax.random.uniform(k_b1, (hidden_size,),
                            minval=-bound1, maxval=bound1, dtype=jnp.float32)

    bound2 = 1.0 / (hidden_size ** 0.5)
    w2 = jax.random.uniform(k_w2, (hidden_size, 1),
                            minval=-bound2, maxval=bound2, dtype=jnp.float32)
    b2 = jax.random.uniform(k_b2, (1,),
                            minval=-bound2, maxval=bound2, dtype=jnp.float32)

    out = regression_model_forward(x, w1, b1, w2, b2)
    out = jax.block_until_ready(out)

    # Reference check in plain JAX.
    ref = jnp.maximum(x @ w1 + b1, 0.0) @ w2 + b2
    assert out.shape == (batch, 1)
    assert jnp.allclose(out, ref, atol=1e-5, rtol=1e-5)

    print("KERNEL_OK")
</pallas_src>

<mosaic_0001>
module attributes {stable_mosaic.version = 11 : i64} {
  func.func @_mlp_kernel(%arg0: i32, %arg1: memref<8x16xf32, #tpu.memory_space<vmem>>, %arg2: memref<16x32xf32, #tpu.memory_space<vmem>>, %arg3: memref<1x32xf32, #tpu.memory_space<vmem>>, %arg4: memref<1x32xf32, #tpu.memory_space<vmem>>, %arg5: memref<1x1xf32, #tpu.memory_space<vmem>>, %arg6: memref<8x1xf32, #tpu.memory_space<vmem>>) attributes {dimension_semantics = [#tpu.dimension_semantics<parallel>], iteration_bounds = array<i64: 1>, scalar_prefetch = 0 : i64, scratch_operands = 0 : i64, tpu.core_type = #tpu.core_type<tc>, window_params = [{transform_indices = @transform_0, window_bounds = array<i64: 8, 16>}, {pipeline_mode = #tpu.pipeline_mode<synchronous>, transform_indices = @transform_1, window_bounds = array<i64: 16, 32>}, {pipeline_mode = #tpu.pipeline_mode<synchronous>, transform_indices = @transform_2, window_bounds = array<i64: 1, 32>}, {pipeline_mode = #tpu.pipeline_mode<synchronous>, transform_indices = @transform_3, window_bounds = array<i64: 1, 32>}, {pipeline_mode = #tpu.pipeline_mode<synchronous>, transform_indices = @transform_4, window_bounds = array<i64: 1, 1>}, {transform_indices = @transform_5, window_bounds = array<i64: 8, 1>}]} {
    %c0 = arith.constant 0 : index
    %c0_0 = arith.constant 0 : index
    %0 = vector.load %arg1[%c0, %c0_0] : memref<8x16xf32, #tpu.memory_space<vmem>>, vector<8x16xf32>
    %c0_1 = arith.constant 0 : index
    %c0_2 = arith.constant 0 : index
    %1 = vector.load %arg2[%c0_1, %c0_2] : memref<16x32xf32, #tpu.memory_space<vmem>>, vector<16x32xf32>
    %cst = arith.constant dense<0.000000e+00> : vector<8x32xf32>
    %2 = tpu.matmul %0, %1, %cst {dimension_numbers = #tpu.dot_dimension_numbers<[1], [0], [0], [1], [0, 0, 1, 1], [], []>} : vector<8x16xf32>, vector<16x32xf32>, vector<8x32xf32> -> vector<8x32xf32>
    %c0_3 = arith.constant 0 : index
    %c0_4 = arith.constant 0 : index
    %3 = vector.load %arg3[%c0_3, %c0_4] : memref<1x32xf32, #tpu.memory_space<vmem>>, vector<1x32xf32>
    %4 = vector.broadcast %3 : vector<1x32xf32> to vector<8x32xf32>
    %5 = arith.addf %2, %4 : vector<8x32xf32>
    %cst_5 = arith.constant 0.000000e+00 : f32
    %6 = vector.broadcast %cst_5 : f32 to vector<8x32xf32>
    %7 = arith.maximumf %5, %6 : vector<8x32xf32>
    %c0_6 = arith.constant 0 : index
    %c0_7 = arith.constant 0 : index
    %8 = vector.load %arg4[%c0_6, %c0_7] : memref<1x32xf32, #tpu.memory_space<vmem>>, vector<1x32xf32>
    %9 = vector.broadcast %8 : vector<1x32xf32> to vector<8x32xf32>
    %10 = arith.mulf %7, %9 : vector<8x32xf32>
    %cst_8 = arith.constant dense<0.000000e+00> : vector<8xf32>
    %11 = vector.multi_reduction <add>, %10, %cst_8 [1] : vector<8x32xf32> to vector<8xf32>
    %12 = vector.shape_cast %11 : vector<8xf32> to vector<8x1xf32>
    %c0_9 = arith.constant 0 : index
    %c0_10 = arith.constant 0 : index
    %13 = vector.load %arg5[%c0_9, %c0_10] : memref<1x1xf32, #tpu.memory_space<vmem>>, vector<1x1xf32>
    %14 = vector.broadcast %13 : vector<1x1xf32> to vector<8x1xf32>
    %15 = arith.addf %12, %14 : vector<8x1xf32>
    %c0_11 = arith.constant 0 : index
    %c0_12 = arith.constant 0 : index
    %16 = vector.load %arg6[%c0_11, %c0_12] : memref<8x1xf32, #tpu.memory_space<vmem>>, vector<8x1xf32>
    tpu.vector_store %arg6[%c0_11, %c0_12], %15 {strides = array<i32>} : memref<8x1xf32, #tpu.memory_space<vmem>>, vector<8x1xf32>,
    return
  }
  func.func @transform_0(%arg0: i32) -> (i32, i32) {
    %c0_i32 = arith.constant 0 : i32
    %c0_i32_0 = arith.constant 0 : i32
    return %arg0, %c0_i32 : i32, i32
  }
  func.func @transform_1(%arg0: i32) -> (i32, i32) {
    %c0_i32 = arith.constant 0 : i32
    %c0_i32_0 = arith.constant 0 : i32
    %c0_i32_1 = arith.constant 0 : i32
    return %c0_i32, %c0_i32_0 : i32, i32
  }
  func.func @transform_2(%arg0: i32) -> (i32, i32) {
    %c0_i32 = arith.constant 0 : i32
    %c0_i32_0 = arith.constant 0 : i32
    %c0_i32_1 = arith.constant 0 : i32
    return %c0_i32, %c0_i32_0 : i32, i32
  }
  func.func @transform_3(%arg0: i32) -> (i32, i32) {
    %c0_i32 = arith.constant 0 : i32
    %c0_i32_0 = arith.constant 0 : i32
    %c0_i32_1 = arith.constant 0 : i32
    return %c0_i32, %c0_i32_0 : i32, i32
  }
  func.func @transform_4(%arg0: i32) -> (i32, i32) {
    %c0_i32 = arith.constant 0 : i32
    %c0_i32_0 = arith.constant 0 : i32
    %c0_i32_1 = arith.constant 0 : i32
    return %c0_i32, %c0_i32_0 : i32, i32
  }
  func.func @transform_5(%arg0: i32) -> (i32, i32) {
    %c0_i32 = arith.constant 0 : i32
    %c0_i32_0 = arith.constant 0 : i32
    return %arg0, %c0_i32 : i32, i32
  }
}

</mosaic_0001>

<llo_original>
// kernel: tpu_custom_call.1
$region0: #{tpu_custom_call.1}
  #allocation0 [shape = 'u32[]', space=smem, size = 0x4, offset = 0x4, fixed_abs, tag = 'smem constant byte address 0x4 - core index']
  #allocation1 [shape = 'u32[144,128]{1,0:T(1,128)}', space=vmem, size = 0x12000, scoped, tag = 'internal scratch']
  #allocation2 [shape = 'f32[1,1]{1,0:T(1,128)S(1)}', space=vmem, size = 0x200, scoped, tag = 'scoped memory for tpu_custom_call.1']
  %s0 = inlined_call_operand.hbm [shape: f32[8,16], index: 0, kind: input, shape index: {}]
  %s1 = inlined_call_operand.hbm [shape: f32[16,32], index: 1, kind: input, shape index: {}]
  %s2 = inlined_call_operand.vmem [shape: f32[1,32], index: 2, kind: input, shape index: {}]
  %s3 = inlined_call_operand.vmem [shape: f32[1,32], index: 3, kind: input, shape index: {}]
  %s4 = inlined_call_operand.<no memory space> [shape: f32[1,1], index: 4, kind: input, shape index: {}]
  %s5 = inlined_call_operand.vmem [shape: f32[8,1], index: 5, kind: output, shape index: {}]
  %s6 = sld [smem:[#allocation0]]
  $region38: #{tpu_custom_call.1} parent=0
    _
  %s8 = ssub.s32 1, %s6
  %s9 = scalar_select 0, %s8, %s6
  %v10 = vstv %s4
  %11 = vst [vmem:[#allocation2] sm:$0x1] %v10
  $region1: #{tpu_custom_call.1} parent=0
    #allocation3 [shape = 'u8[4096]{0}', space=vmem, size = 0x1000, scoped, tag = 'input window, operand 0, single buffered']
    #allocation4 [shape = 's32[1]{0}', space=sflag, size = 0x4, scoped, tag = 'scoped memory for tpu_custom_call.1']
    #allocation5 [shape = 'u8[8192]{0}', space=vmem, size = 0x2000, scoped, tag = 'input window, operand 1, single buffered']
    #allocation6 [shape = 's32[1]{0}', space=sflag, size = 0x4, scoped, tag = 'scoped memory for tpu_custom_call.1']
    %12 = vsyncpa [#allocation4], 0
    %13 = vsyncpa [#allocation6], 0
    // Predicated region
    $region2: #{tpu_custom_call.1} parent=1 // pred_check
      _
    $region3: #{tpu_custom_call.1} parent=1 // pred_check_branch
      %15 = sbr.rel (0) target = $region5
    $region4: #{tpu_custom_call.1} parent=1 // pred_region
      %s17 = ssub.s32 128, 128
      %18 = vsyncadd [#allocation4], %s17
      %s20 = sshll.u32 [#allocation3], 4
      %s21 = int_to_ptr.vmem [resolvable:$true] %s20
      %23 = dma.hbm_to_vmem [thread:$0]  %s0, 128, %s21, [#allocation4]
    $region5: #{tpu_custom_call.1} parent=1 // pred_fallthru
      _
    // Predicated region
    $region6: #{tpu_custom_call.1} parent=1 // pred_check
      _
    $region7: #{tpu_custom_call.1} parent=1 // pred_check_branch
      %25 = sbr.rel (0) target = $region9
    $region8: #{tpu_custom_call.1} parent=1 // pred_region
      %s27 = ssub.s32 256, 256
      %28 = vsyncadd [#allocation6], %s27
      %s29 = sshll.u32 [#allocation5], 4
      %s30 = int_to_ptr.vmem [resolvable:$true] %s29
      %35 = dma.hbm_to_vmem [thread:$0]  %s1, 256, %s30, [#allocation6], 128, 128, 8
    $region9: #{tpu_custom_call.1} parent=1 // pred_fallthru
      _
    // Predicated region
    $region10: #{tpu_custom_call.1} parent=1 // pred_check
      _
    $region11: #{tpu_custom_call.1} parent=1 // pred_check_branch
      %37 = sbr.rel (0) target = $region13
    $region12: #{tpu_custom_call.1} parent=1 // pred_region
      _
    $region13: #{tpu_custom_call.1} parent=1 // pred_fallthru
      _
    // Predicated region
    $region14: #{tpu_custom_call.1} parent=1 // pred_check
      _
    $region15: #{tpu_custom_call.1} parent=1 // pred_check_branch
      %39 = sbr.rel (0) target = $region17
    $region16: #{tpu_custom_call.1} parent=1 // pred_region
      _
    $region17: #{tpu_custom_call.1} parent=1 // pred_fallthru
      _
    // Predicated region
    $region18: #{tpu_custom_call.1} parent=1 // pred_check
      _
    $region19: #{tpu_custom_call.1} parent=1 // pred_check_branch
      %41 = sbr.rel (0) target = $region21
    $region20: #{tpu_custom_call.1} parent=1 // pred_region
      _
    $region21: #{tpu_custom_call.1} parent=1 // pred_fallthru
      _
    // Predicated region
    $region22: #{tpu_custom_call.1} parent=1 // pred_check
      _
    $region23: #{tpu_custom_call.1} parent=1 // pred_check_branch
      %43 = sbr.rel (0) target = $region25
    $region24: #{tpu_custom_call.1} parent=1 // pred_region
      %44 = dma.done [#allocation4], 128
    $region25: #{tpu_custom_call.1} parent=1 // pred_fallthru
      _
    // Predicated region
    $region26: #{tpu_custom_call.1} parent=1 // pred_check
      _
    $region27: #{tpu_custom_call.1} parent=1 // pred_check_branch
      %46 = sbr.rel (0) target = $region29
    $region28: #{tpu_custom_call.1} parent=1 // pred_region
      %47 = dma.done [#allocation6], 256
    $region29: #{tpu_custom_call.1} parent=1 // pred_fallthru
      _
    %v48 = vld [vmem:[#allocation3] sm:$0xff]
    %v49 = vld [vmem:[#allocation5] sm:$0xff]
    %v50 = vld [vmem:[#allocation5 + $0x8] sm:$0xff]
    %v51 = vld [vmem:[%s2] sm:$0x1]
    %v53 = vlaneseq
    %v54 = vshrl.u32 %v53, 7
    %v55 = vsub.s32 0, %v54
    %v56 = vrot.slane %v51, %v55
    %vm58 = vcmask 130048
    %v60 = vsel %vm58, %v48, 0
    %62 = vmatprep.subr.mxu0 0.0
    %63 = vmatpush1.msra.mxu0 %v49
    %64 = vmatprep.subr.mxu0 0.0
    %65 = vmatpush1.msra.mxu0 %v50
    %66 = vmatprep.subr.mxu0 0.0
    %67 = vmatpush1.msra.mxu0 0.0
    %68 = vmatprep.subr.mxu0 0.0
    %69 = vmatpush1.msra.mxu0 0.0
    %70 = vmatprep.subr.mxu0 0.0
    %71 = vmatpush1.msra.mxu0 0.0
    %72 = vmatprep.subr.mxu0 0.0
    %73 = vmatpush1.msra.mxu0 0.0
    %74 = vmatprep.subr.mxu0 0.0
    %75 = vmatpush1.msra.mxu0 0.0
    %76 = vmatprep.subr.mxu0 0.0
    %77 = vmatpush1.msra.mxu0 0.0
    %78 = vmatprep.subr.mxu0 0.0
    %79 = vmatpush1.msra.mxu0 0.0
    %80 = vmatprep.subr.mxu0 0.0
    %81 = vmatpush1.msra.mxu0 0.0
    %82 = vmatprep.subr.mxu0 0.0
    %83 = vmatpush1.msra.mxu0 0.0
    %84 = vmatprep.subr.mxu0 0.0
    %85 = vmatpush1.msra.mxu0 0.0
    %86 = vmatprep.subr.mxu0 0.0
    %87 = vmatpush1.msra.mxu0 0.0
    %88 = vmatprep.subr.mxu0 0.0
    %89 = vmatpush1.msra.mxu0 0.0
    %90 = vmatprep.subr.mxu0 0.0
    %91 = vmatpush1.msra.mxu0 0.0
    %92 = vmatprep.subr.mxu0 0.0
    %93 = vmatpush1.msra.mxu0 0.0
    %94 = vmatprep.subr.mxu0 0.0
    %95 = vmatpush1.msra.mxu0 0.0
    %96 = vmatprep.subr.mxu0 0.0
    %97 = vmatpush1.msra.mxu0 0.0
    %98 = vmatprep.subr.mxu0 0.0
    %99 = vmatpush1.msra.mxu0 0.0
    %100 = vmatprep.subr.mxu0 0.0
    %101 = vmatpush1.msra.mxu0 0.0
    %102 = vmatprep.subr.mxu0 0.0
    %103 = vmatpush1.msra.mxu0 0.0
    %104 = vmatprep.subr.mxu0 0.0
    %105 = vmatpush1.msra.mxu0 0.0
    %106 = vmatprep.subr.mxu0 0.0
    %107 = vmatpush1.msra.mxu0 0.0
    %108 = vmatprep.subr.mxu0 0.0
    %109 = vmatpush1.msra.mxu0 0.0
    %110 = vmatprep.subr.mxu0 0.0
    %111 = vmatpush1.msra.mxu0 0.0
    %112 = vmatprep.subr.mxu0 0.0
    %113 = vmatpush1.msra.mxu0 0.0
    %114 = vmatprep.subr.mxu0 0.0
    %115 = vmatpush1.msra.mxu0 0.0
    %116 = vmatprep.subr.mxu0 0.0
    %117 = vmatpush1.msra.mxu0 0.0
    %118 = vmatprep.subr.mxu0 0.0
    %119 = vmatpush1.msra.mxu0 0.0
    %120 = vmatprep.subr.mxu0 0.0
    %121 = vmatpush1.msra.mxu0 0.0
    %122 = vmatprep.subr.mxu0 0.0
    %123 = vmatpush1.msra.mxu0 0.0
    %124 = vmatprep.subr.mxu0 0.0
    %125 = vmatpush1.msra.mxu0 0.0
    %126 = vmatprep.mubr.f32.mxu0 0.0
    %127 = vmatmul.mubr.f32.gmra.mrb[0].mxu0 %v60
    %v128 = vpop.f32.mrb[0].mxu0
    %v129 = vadd.f32 %v56, %v128
    %v130 = vpop.f32.mrb[0].mxu0
    %131 = vdwg.mxu0
    %v132 = vmax.f32 %v129, 0.0
    %v133 = vld [vmem:[%s3] sm:$0x1]
    %v135 = vlaneseq
    %v136 = vshrl.u32 %v135, 7
    %v137 = vsub.s32 0, %v136
    %v138 = vrot.slane %v133, %v137
    %v140 = vmul.f32 %v132, %v138
    %vm141 = vcmask 261120
    %v142 = vsel %vm141, %v140, 0.0
    %143 = vadd.xlane.f32.xlu0 %v142
    %v144 = vpop.xlane.xlu0 %143
    %v145 = vld [vmem:[#allocation2] sm:$0x1]
    %v147 = vlaneseq
    %v148 = vshrl.u32 %v147, 7
    %v149 = vsub.s32 0, %v148
    %v150 = vrot.slane %v145, %v149
    %v152 = vadd.f32 %v144, %v150
    %vm153 = vcmask 7168
    %154 = vst.msk [vmem:[%s5] sm:$0xff] %vm153, %v152
    // Predicated region
    $region30: #{tpu_custom_call.1} parent=1 // pred_check
      _
    $region31: #{tpu_custom_call.1} parent=1 // pred_check_branch
      %156 = sbr.rel (0) target = $region33
    $region32: #{tpu_custom_call.1} parent=1 // pred_region
      _
    $region33: #{tpu_custom_call.1} parent=1 // pred_fallthru
      _
    // Predicated region
    $region34: #{tpu_custom_call.1} parent=1 // pred_check
      _
    $region35: #{tpu_custom_call.1} parent=1 // pred_check_branch
      %158 = sbr.rel (0) target = $region37
    $region36: #{tpu_custom_call.1} parent=1 // pred_region
      _
    $region37: #{tpu_custom_call.1} parent=1 // pred_fallthru
      _
    %159 = vsyncpa [#allocation4], 1
    %160 = vsyncpa [#allocation6], 1

</llo_original>
